<compile_context>
chip_gen: v5e
topology: v5e:2x2
jax: 0.10.0
libtpu: 0.0.40
codegen_flags: <defaults>
</compile_context>

<pallas_src>
import jax
import jax.numpy as jnp
from jax.experimental import pallas as pl
from jax.experimental.pallas import tpu as pltpu


def _critic_kernel(x_ref, w1_ref, b1_ref, w2_ref, b2_ref, w3t_ref, b3_ref,
                   out_ref):
    x = x_ref[...]                                              # [TB, obs_dim]
    h1 = jnp.tanh(jnp.dot(x, w1_ref[...],
                          preferred_element_type=jnp.float32) + b1_ref[...])
    h2 = jnp.tanh(jnp.dot(h1, w2_ref[...],
                          preferred_element_type=jnp.float32) + b2_ref[...])
    # Last layer has out_features == 1: an N=1 MXU matmul wastes the whole MXU
    # width, so use VPU multiply + cross-lane (XLU) reduce instead.  The reduce
    # over the lane axis also leaves the [TB] result lane-dense for the store.
    v = jnp.sum(h2 * w3t_ref[...], axis=-1)[None, :] + b3_ref[...]   # [1, TB]
    out_ref[...] = v.astype(out_ref.dtype)


def mlp_critic_forward(obs, params, *, block_b=1024):
    """obs: [B, obs_dim] f32; params: ((w1,b1),(w2,b2),(w3,b3)) with w_i stored
    [in, out] and b_i stored [1, out].  Returns value estimates with shape [B]."""
    (w1, b1), (w2, b2), (w3, b3) = params
    B, obs_dim = obs.shape

    # Batch tile: multiple of 128 (lane-dense output), capped at block_b rows.
    TB = min(block_b, pl.cdiv(B, 128) * 128)
    B_pad = pl.cdiv(B, TB) * TB
    if B_pad != B:
        obs = jnp.pad(obs, ((0, B_pad - B), (0, 0)))
    num_tiles = B_pad // TB

    w3t = jnp.transpose(w3)          # [1, h_last] -> broadcast row for VPU path
    b3s = b3.reshape(1, 1)           # scalar bias, broadcast-added in kernel

    resident = lambda arr: pl.BlockSpec(arr.shape, lambda i: (0,) * arr.ndim)

    out2d = pl.pallas_call(
        _critic_kernel,
        out_shape=jax.ShapeDtypeStruct((1, B_pad), jnp.float32),
        grid_spec=pltpu.PrefetchScalarGridSpec(
            num_scalar_prefetch=0,
            grid=(num_tiles,),
            in_specs=[
                pl.BlockSpec((TB, obs_dim), lambda i: (i, 0)),   # obs tile
                resident(w1), resident(b1),
                resident(w2), resident(b2),
                resident(w3t), resident(b3s),
            ],
            out_specs=pl.BlockSpec((1, TB), lambda i: (0, i)),   # lane-dense slab
        ),
        compiler_params=pltpu.CompilerParams(
            dimension_semantics=("parallel",),                   # megacore on v7x
        ),
    )(obs, w1, b1, w2, b2, w3t, b3s)

    # torch.squeeze(..., -1): drop the trailing singleton -> [B]
    return out2d[0, :B]


def init_params(key, obs_dim, hidden_sizes):
    """Deterministic PyTorch-style nn.Linear init: U(-1/sqrt(fan_in), 1/sqrt(fan_in))."""
    sizes = [obs_dim] + list(hidden_sizes) + [1]
    params = []
    for i in range(len(sizes) - 1):
        fan_in, fan_out = sizes[i], sizes[i + 1]
        key, kw, kb = jax.random.split(key, 3)
        bound = 1.0 / (fan_in ** 0.5)
        w = jax.random.uniform(kw, (fan_in, fan_out), jnp.float32, -bound, bound)
        b = jax.random.uniform(kb, (1, fan_out), jnp.float32, -bound, bound)
        params.append((w, b))
    return tuple(params)


if __name__ == "__main__":
    B, obs_dim = 8, 16
    hidden_sizes = (32, 32)

    key = jax.random.PRNGKey(0)
    key, kobs = jax.random.split(key)
    obs = jax.random.normal(kobs, (B, obs_dim), jnp.float32)

    params = init_params(key, obs_dim, hidden_sizes)

    values = mlp_critic_forward(obs, params)
    jax.block_until_ready(values)

    # reference check in plain JAX (same math path)
    (w1, b1), (w2, b2), (w3, b3) = params
    ref = jnp.squeeze(
        jnp.dot(jnp.tanh(jnp.dot(jnp.tanh(jnp.dot(obs, w1) + b1), w2) + b2), w3) + b3,
        -1)
    assert values.shape == (B,), values.shape
    assert jnp.allclose(values, ref, atol=1e-5), "mismatch vs reference"

    print("KERNEL_OK")
</pallas_src>

<mosaic_0001>
module attributes {stable_mosaic.version = 11 : i64} {
  func.func @_critic_kernel(%arg0: i32, %arg1: memref<128x16xf32, #tpu.memory_space<vmem>>, %arg2: memref<16x32xf32, #tpu.memory_space<vmem>>, %arg3: memref<1x32xf32, #tpu.memory_space<vmem>>, %arg4: memref<32x32xf32, #tpu.memory_space<vmem>>, %arg5: memref<1x32xf32, #tpu.memory_space<vmem>>, %arg6: memref<1x32xf32, #tpu.memory_space<vmem>>, %arg7: memref<1x1xf32, #tpu.memory_space<vmem>>, %arg8: memref<1x128xf32, #tpu.memory_space<vmem>>) attributes {dimension_semantics = [#tpu.dimension_semantics<parallel>], iteration_bounds = array<i64: 1>, scalar_prefetch = 0 : i64, scratch_operands = 0 : i64, tpu.core_type = #tpu.core_type<tc>, window_params = [{transform_indices = @transform_0, window_bounds = array<i64: 128, 16>}, {pipeline_mode = #tpu.pipeline_mode<synchronous>, transform_indices = @transform_1, window_bounds = array<i64: 16, 32>}, {pipeline_mode = #tpu.pipeline_mode<synchronous>, transform_indices = @transform_2, window_bounds = array<i64: 1, 32>}, {pipeline_mode = #tpu.pipeline_mode<synchronous>, transform_indices = @transform_3, window_bounds = array<i64: 32, 32>}, {pipeline_mode = #tpu.pipeline_mode<synchronous>, transform_indices = @transform_4, window_bounds = array<i64: 1, 32>}, {pipeline_mode = #tpu.pipeline_mode<synchronous>, transform_indices = @transform_5, window_bounds = array<i64: 1, 32>}, {pipeline_mode = #tpu.pipeline_mode<synchronous>, transform_indices = @transform_6, window_bounds = array<i64: 1, 1>}, {transform_indices = @transform_7, window_bounds = array<i64: 1, 128>}]} {
    %c0 = arith.constant 0 : index
    %c0_0 = arith.constant 0 : index
    %0 = vector.load %arg1[%c0, %c0_0] : memref<128x16xf32, #tpu.memory_space<vmem>>, vector<128x16xf32>
    %c0_1 = arith.constant 0 : index
    %c0_2 = arith.constant 0 : index
    %1 = vector.load %arg2[%c0_1, %c0_2] : memref<16x32xf32, #tpu.memory_space<vmem>>, vector<16x32xf32>
    %cst = arith.constant dense<0.000000e+00> : vector<128x32xf32>
    %2 = tpu.matmul %0, %1, %cst {dimension_numbers = #tpu.dot_dimension_numbers<[1], [0], [0], [1], [0, 0, 1, 1], [], []>} : vector<128x16xf32>, vector<16x32xf32>, vector<128x32xf32> -> vector<128x32xf32>
    %c0_3 = arith.constant 0 : index
    %c0_4 = arith.constant 0 : index
    %3 = vector.load %arg3[%c0_3, %c0_4] : memref<1x32xf32, #tpu.memory_space<vmem>>, vector<1x32xf32>
    %4 = vector.broadcast %3 : vector<1x32xf32> to vector<128x32xf32>
    %5 = arith.addf %2, %4 : vector<128x32xf32>
    %6 = math.tanh %5 : vector<128x32xf32>
    %c0_5 = arith.constant 0 : index
    %c0_6 = arith.constant 0 : index
    %7 = vector.load %arg4[%c0_5, %c0_6] : memref<32x32xf32, #tpu.memory_space<vmem>>, vector<32x32xf32>
    %cst_7 = arith.constant dense<0.000000e+00> : vector<128x32xf32>
    %8 = tpu.matmul %6, %7, %cst_7 {dimension_numbers = #tpu.dot_dimension_numbers<[1], [0], [0], [1], [0, 0, 1, 1], [], []>} : vector<128x32xf32>, vector<32x32xf32>, vector<128x32xf32> -> vector<128x32xf32>
    %c0_8 = arith.constant 0 : index
    %c0_9 = arith.constant 0 : index
    %9 = vector.load %arg5[%c0_8, %c0_9] : memref<1x32xf32, #tpu.memory_space<vmem>>, vector<1x32xf32>
    %10 = vector.broadcast %9 : vector<1x32xf32> to vector<128x32xf32>
    %11 = arith.addf %8, %10 : vector<128x32xf32>
    %12 = math.tanh %11 : vector<128x32xf32>
    %c0_10 = arith.constant 0 : index
    %c0_11 = arith.constant 0 : index
    %13 = vector.load %arg6[%c0_10, %c0_11] : memref<1x32xf32, #tpu.memory_space<vmem>>, vector<1x32xf32>
    %14 = vector.broadcast %13 : vector<1x32xf32> to vector<128x32xf32>
    %15 = arith.mulf %12, %14 : vector<128x32xf32>
    %cst_12 = arith.constant dense<0.000000e+00> : vector<128xf32>
    %16 = vector.multi_reduction <add>, %15, %cst_12 [1] : vector<128x32xf32> to vector<128xf32>
    %17 = vector.shape_cast %16 : vector<128xf32> to vector<1x128xf32>
    %c0_13 = arith.constant 0 : index
    %c0_14 = arith.constant 0 : index
    %18 = vector.load %arg7[%c0_13, %c0_14] : memref<1x1xf32, #tpu.memory_space<vmem>>, vector<1x1xf32>
    %19 = vector.broadcast %18 : vector<1x1xf32> to vector<1x128xf32>
    %20 = arith.addf %17, %19 : vector<1x128xf32>
    %c0_15 = arith.constant 0 : index
    %c0_16 = arith.constant 0 : index
    %21 = vector.load %arg8[%c0_15, %c0_16] : memref<1x128xf32, #tpu.memory_space<vmem>>, vector<1x128xf32>
    tpu.vector_store %arg8[%c0_15, %c0_16], %20 {strides = array<i32>} : memref<1x128xf32, #tpu.memory_space<vmem>>, vector<1x128xf32>,
    return
  }
  func.func @transform_0(%arg0: i32) -> (i32, i32) {
    %c0_i32 = arith.constant 0 : i32
    %c0_i32_0 = arith.constant 0 : i32
    return %arg0, %c0_i32 : i32, i32
  }
  func.func @transform_1(%arg0: i32) -> (i32, i32) {
    %c0_i32 = arith.constant 0 : i32
    %c0_i32_0 = arith.constant 0 : i32
    %c0_i32_1 = arith.constant 0 : i32
    return %c0_i32, %c0_i32_0 : i32, i32
  }
  func.func @transform_2(%arg0: i32) -> (i32, i32) {
    %c0_i32 = arith.constant 0 : i32
    %c0_i32_0 = arith.constant 0 : i32
    %c0_i32_1 = arith.constant 0 : i32
    return %c0_i32, %c0_i32_0 : i32, i32
  }
  func.func @transform_3(%arg0: i32) -> (i32, i32) {
    %c0_i32 = arith.constant 0 : i32
    %c0_i32_0 = arith.constant 0 : i32
    %c0_i32_1 = arith.constant 0 : i32
    return %c0_i32, %c0_i32_0 : i32, i32
  }
  func.func @transform_4(%arg0: i32) -> (i32, i32) {
    %c0_i32 = arith.constant 0 : i32
    %c0_i32_0 = arith.constant 0 : i32
    %c0_i32_1 = arith.constant 0 : i32
    return %c0_i32, %c0_i32_0 : i32, i32
  }
  func.func @transform_5(%arg0: i32) -> (i32, i32) {
    %c0_i32 = arith.constant 0 : i32
    %c0_i32_0 = arith.constant 0 : i32
    %c0_i32_1 = arith.constant 0 : i32
    return %c0_i32, %c0_i32_0 : i32, i32
  }
  func.func @transform_6(%arg0: i32) -> (i32, i32) {
    %c0_i32 = arith.constant 0 : i32
    %c0_i32_0 = arith.constant 0 : i32
    %c0_i32_1 = arith.constant 0 : i32
    return %c0_i32, %c0_i32_0 : i32, i32
  }
  func.func @transform_7(%arg0: i32) -> (i32, i32) {
    %c0_i32 = arith.constant 0 : i32
    %c0_i32_0 = arith.constant 0 : i32
    return %c0_i32, %arg0 : i32, i32
  }
}

</mosaic_0001>

<llo_original>
// kernel: tpu_custom_call.1
$region0: #{tpu_custom_call.1}
  #allocation0 [shape = 'u32[]', space=smem, size = 0x4, offset = 0x4, fixed_abs, tag = 'smem constant byte address 0x4 - core index']
  #allocation1 [shape = 'u32[72,128]{1,0:T(1,128)}', space=vmem, size = 0x9000, scoped, tag = 'internal scratch']
  #allocation2 [shape = 'f32[1,1]{1,0:T(1,128)S(1)}', space=vmem, size = 0x200, scoped, tag = 'scoped memory for tpu_custom_call.1']
  %s0 = inlined_call_operand.vmem [shape: f32[128,16], index: 0, kind: input, shape index: {}]
  %s1 = inlined_call_operand.vmem [shape: f32[16,32], index: 1, kind: input, shape index: {}]
  %s2 = inlined_call_operand.vmem [shape: f32[1,32], index: 2, kind: input, shape index: {}]
  %s3 = inlined_call_operand.vmem [shape: f32[32,32], index: 3, kind: input, shape index: {}]
  %s4 = inlined_call_operand.vmem [shape: f32[1,32], index: 4, kind: input, shape index: {}]
  %s5 = inlined_call_operand.vmem [shape: f32[1,32], index: 5, kind: input, shape index: {}]
  %s6 = inlined_call_operand.<no memory space> [shape: f32[1,1], index: 6, kind: input, shape index: {}]
  %s7 = inlined_call_operand.hbm [shape: f32[1,128], index: 7, kind: output, shape index: {}]
  %s8 = sld [smem:[#allocation0]]
  $region38: #{tpu_custom_call.1} parent=0
    _
  %s10 = ssub.s32 1, %s8
  %s11 = scalar_select 0, %s10, %s8
  %v12 = vstv %s6
  %13 = vst [vmem:[#allocation2] sm:$0x1] %v12
  $region1: #{tpu_custom_call.1} parent=0
    #allocation3 [shape = 'u8[512]{0}', space=vmem, size = 0x400, scoped, tag = 'output window, operand 0, single buffered']
    #allocation4 [shape = 's32[1]{0}', space=sflag, size = 0x4, scoped, tag = 'scoped memory for tpu_custom_call.1']
    %14 = vsyncpa [#allocation4], 0
    // Predicated region
    $region2: #{tpu_custom_call.1} parent=1 // pred_check
      _
    $region3: #{tpu_custom_call.1} parent=1 // pred_check_branch
      %16 = sbr.rel (0) target = $region5
    $region4: #{tpu_custom_call.1} parent=1 // pred_region
      _
    $region5: #{tpu_custom_call.1} parent=1 // pred_fallthru
      _
    // Predicated region
    $region6: #{tpu_custom_call.1} parent=1 // pred_check
      _
    $region7: #{tpu_custom_call.1} parent=1 // pred_check_branch
      %18 = sbr.rel (0) target = $region9
    $region8: #{tpu_custom_call.1} parent=1 // pred_region
      _
    $region9: #{tpu_custom_call.1} parent=1 // pred_fallthru
      _
    // Predicated region
    $region10: #{tpu_custom_call.1} parent=1 // pred_check
      _
    $region11: #{tpu_custom_call.1} parent=1 // pred_check_branch
      %20 = sbr.rel (0) target = $region13
    $region12: #{tpu_custom_call.1} parent=1 // pred_region
      _
    $region13: #{tpu_custom_call.1} parent=1 // pred_fallthru
      _
    // Predicated region
    $region14: #{tpu_custom_call.1} parent=1 // pred_check
      _
    $region15: #{tpu_custom_call.1} parent=1 // pred_check_branch
      %22 = sbr.rel (0) target = $region17
    $region16: #{tpu_custom_call.1} parent=1 // pred_region
      _
    $region17: #{tpu_custom_call.1} parent=1 // pred_fallthru
      _
    // Predicated region
    $region18: #{tpu_custom_call.1} parent=1 // pred_check
      _
    $region19: #{tpu_custom_call.1} parent=1 // pred_check_branch
      %24 = sbr.rel (0) target = $region21
    $region20: #{tpu_custom_call.1} parent=1 // pred_region
      _
    $region21: #{tpu_custom_call.1} parent=1 // pred_fallthru
      _
    // Predicated region
    $region22: #{tpu_custom_call.1} parent=1 // pred_check
      _
    $region23: #{tpu_custom_call.1} parent=1 // pred_check_branch
      %26 = sbr.rel (0) target = $region25
    $region24: #{tpu_custom_call.1} parent=1 // pred_region
      _
    $region25: #{tpu_custom_call.1} parent=1 // pred_fallthru
      _
    // Predicated region
    $region26: #{tpu_custom_call.1} parent=1 // pred_check
      _
    $region27: #{tpu_custom_call.1} parent=1 // pred_check_branch
      %28 = sbr.rel (0) target = $region29
    $region28: #{tpu_custom_call.1} parent=1 // pred_region
      _
    $region29: #{tpu_custom_call.1} parent=1 // pred_fallthru
      _
    %v29 = vld [vmem:[%s0] sm:$0xff]
    %v30 = vld [vmem:[%s0 + $0x8] sm:$0xff]
    %v31 = vld [vmem:[%s0 + $0x10] sm:$0xff]
    %v32 = vld [vmem:[%s0 + $0x18] sm:$0xff]
    %v33 = vld [vmem:[%s0 + $0x20] sm:$0xff]
    %v34 = vld [vmem:[%s0 + $0x28] sm:$0xff]
    %v35 = vld [vmem:[%s0 + $0x30] sm:$0xff]
    %v36 = vld [vmem:[%s0 + $0x38] sm:$0xff]
    %v37 = vld [vmem:[%s0 + $0x40] sm:$0xff]
    %v38 = vld [vmem:[%s0 + $0x48] sm:$0xff]
    %v39 = vld [vmem:[%s0 + $0x50] sm:$0xff]
    %v40 = vld [vmem:[%s0 + $0x58] sm:$0xff]
    %v41 = vld [vmem:[%s0 + $0x60] sm:$0xff]
    %v42 = vld [vmem:[%s0 + $0x68] sm:$0xff]
    %v43 = vld [vmem:[%s0 + $0x70] sm:$0xff]
    %v44 = vld [vmem:[%s0 + $0x78] sm:$0xff]
    %v45 = vld [vmem:[%s1] sm:$0xff]
    %v46 = vld [vmem:[%s1 + $0x8] sm:$0xff]
    %v47 = vld [vmem:[%s2] sm:$0x1]
    %v49 = vperm.slane %v47, 0
    %vm51 = vcmask 130048
    %v53 = vsel %vm51, %v29, 0
    %v56 = vsel %vm51, %v30, 0
    %v59 = vsel %vm51, %v31, 0
    %v62 = vsel %vm51, %v32, 0
    %v65 = vsel %vm51, %v33, 0
    %v68 = vsel %vm51, %v34, 0
    %v71 = vsel %vm51, %v35, 0
    %v74 = vsel %vm51, %v36, 0
    %v77 = vsel %vm51, %v37, 0
    %v80 = vsel %vm51, %v38, 0
    %v83 = vsel %vm51, %v39, 0
    %v86 = vsel %vm51, %v40, 0
    %v89 = vsel %vm51, %v41, 0
    %v92 = vsel %vm51, %v42, 0
    %v95 = vsel %vm51, %v43, 0
    %v98 = vsel %vm51, %v44, 0
    %100 = vmatpush.msra.mxu0 0.0
    %101 = vmatpush.msra.mxu0 0.0
    %102 = vmatpush.msra.mxu0 0.0
    %103 = vmatpush.msra.mxu0 0.0
    %104 = vmatpush.msra.mxu0 0.0
    %105 = vmatpush.msra.mxu0 0.0
    %106 = vmatpush.msra.mxu0 0.0
    %107 = vmatpush.msra.mxu0 0.0
    %108 = vmatpush.msra.mxu0 0.0
    %109 = vmatpush.msra.mxu0 0.0
    %110 = vmatpush.msra.mxu0 0.0
    %111 = vmatpush.msra.mxu0 0.0
    %112 = vmatpush.msra.mxu0 0.0
    %113 = vmatpush.msra.mxu0 0.0
    %114 = vmatpush.msra.mxu0 %v46
    %115 = vmatpush.msra.mxu0 %v45
    %116 = vmatmul.f32.gmra.mxu0 %v53
    %v117 = vpop.f32.mrf.mxu0
    %v118 = vadd.f32 %v49, %v117
    %119 = vmatmul.f32.gmra.mxu0 %v56
    %v120 = vpop.f32.mrf.mxu0
    %v121 = vadd.f32 %v49, %v120
    %122 = vmatmul.f32.gmra.mxu0 %v59
    %v123 = vpop.f32.mrf.mxu0
    %v124 = vadd.f32 %v49, %v123
    %125 = vmatmul.f32.gmra.mxu0 %v62
    %v126 = vpop.f32.mrf.mxu0
    %v127 = vadd.f32 %v49, %v126
    %128 = vmatmul.f32.gmra.mxu0 %v65
    %v129 = vpop.f32.mrf.mxu0
    %v130 = vadd.f32 %v49, %v129
    %131 = vmatmul.f32.gmra.mxu0 %v68
    %v132 = vpop.f32.mrf.mxu0
    %v133 = vadd.f32 %v49, %v132
    %134 = vmatmul.f32.gmra.mxu0 %v71
    %v135 = vpop.f32.mrf.mxu0
    %v136 = vadd.f32 %v49, %v135
    %137 = vmatmul.f32.gmra.mxu0 %v74
    %v138 = vpop.f32.mrf.mxu0
    %v139 = vadd.f32 %v49, %v138
    %140 = vmatmul.f32.gmra.mxu0 %v77
    %v141 = vpop.f32.mrf.mxu0
    %v142 = vadd.f32 %v49, %v141
    %143 = vmatmul.f32.gmra.mxu0 %v80
    %v144 = vpop.f32.mrf.mxu0
    %v145 = vadd.f32 %v49, %v144
    %146 = vmatmul.f32.gmra.mxu0 %v83
    %v147 = vpop.f32.mrf.mxu0
    %v148 = vadd.f32 %v49, %v147
    %149 = vmatmul.f32.gmra.mxu0 %v86
    %v150 = vpop.f32.mrf.mxu0
    %v151 = vadd.f32 %v49, %v150
    %152 = vmatmul.f32.gmra.mxu0 %v89
    %v153 = vpop.f32.mrf.mxu0
    %v154 = vadd.f32 %v49, %v153
    %155 = vmatmul.f32.gmra.mxu0 %v92
    %v156 = vpop.f32.mrf.mxu0
    %v157 = vadd.f32 %v49, %v156
    %158 = vmatmul.f32.gmra.mxu0 %v95
    %v159 = vpop.f32.mrf.mxu0
    %v160 = vadd.f32 %v49, %v159
    %161 = vmatmul.f32.gmra.mxu0 %v98
    %v162 = vpop.f32.mrf.mxu0
    %v163 = vadd.f32 %v49, %v162
    %164 = vdwg.mxu0
    %v165 = vtanh.pop %v118
    %v166 = vtanh.pop %v121
    %v167 = vtanh.pop %v124
    %v168 = vtanh.pop %v127
    %v169 = vtanh.pop %v130
    %v170 = vtanh.pop %v133
    %v171 = vtanh.pop %v136
    %v172 = vtanh.pop %v139
    %v173 = vtanh.pop %v142
    %v174 = vtanh.pop %v145
    %v175 = vtanh.pop %v148
    %v176 = vtanh.pop %v151
    %v177 = vtanh.pop %v154
    %v178 = vtanh.pop %v157
    %v179 = vtanh.pop %v160
    %v180 = vtanh.pop %v163
    %v181 = vld [vmem:[%s3] sm:$0xff]
    %v182 = vld [vmem:[%s3 + $0x8] sm:$0xff]
    %v183 = vld [vmem:[%s3 + $0x10] sm:$0xff]
    %v184 = vld [vmem:[%s3 + $0x18] sm:$0xff]
    %v185 = vld [vmem:[%s4] sm:$0x1]
    %v187 = vperm.slane %v185, 0
    %vm189 = vcmask 261120
    %v191 = vsel %vm189, %v165, 0
    %v194 = vsel %vm189, %v166, 0
    %v197 = vsel %vm189, %v167, 0
    %v200 = vsel %vm189, %v168, 0
    %v203 = vsel %vm189, %v169, 0
    %v206 = vsel %vm189, %v170, 0
    %v209 = vsel %vm189, %v171, 0
    %v212 = vsel %vm189, %v172, 0
    %v215 = vsel %vm189, %v173, 0
    %v218 = vsel %vm189, %v174, 0
    %v221 = vsel %vm189, %v175, 0
    %v224 = vsel %vm189, %v176, 0
    %v227 = vsel %vm189, %v177, 0
    %v230 = vsel %vm189, %v178, 0
    %v233 = vsel %vm189, %v179, 0
    %v236 = vsel %vm189, %v180, 0
    %238 = vmatpush.msra.mxu0 0.0
    %239 = vmatpush.msra.mxu0 0.0
    %240 = vmatpush.msra.mxu0 0.0
    %241 = vmatpush.msra.mxu0 0.0
    %242 = vmatpush.msra.mxu0 0.0
    %243 = vmatpush.msra.mxu0 0.0
    %244 = vmatpush.msra.mxu0 0.0
    %245 = vmatpush.msra.mxu0 0.0
    %246 = vmatpush.msra.mxu0 0.0
    %247 = vmatpush.msra.mxu0 0.0
    %248 = vmatpush.msra.mxu0 0.0
    %249 = vmatpush.msra.mxu0 0.0
    %250 = vmatpush.msra.mxu0 %v184
    %251 = vmatpush.msra.mxu0 %v183
    %252 = vmatpush.msra.mxu0 %v182
    %253 = vmatpush.msra.mxu0 %v181
    %254 = vmatmul.f32.gmra.mxu0 %v191
    %v255 = vpop.f32.mrf.mxu0
    %v256 = vadd.f32 %v187, %v255
    %257 = vmatmul.f32.gmra.mxu0 %v194
    %v258 = vpop.f32.mrf.mxu0
    %v259 = vadd.f32 %v187, %v258
    %260 = vmatmul.f32.gmra.mxu0 %v197
    %v261 = vpop.f32.mrf.mxu0
    %v262 = vadd.f32 %v187, %v261
    %263 = vmatmul.f32.gmra.mxu0 %v200
    %v264 = vpop.f32.mrf.mxu0
    %v265 = vadd.f32 %v187, %v264
    %266 = vmatmul.f32.gmra.mxu0 %v203
    %v267 = vpop.f32.mrf.mxu0
    %v268 = vadd.f32 %v187, %v267
    %269 = vmatmul.f32.gmra.mxu0 %v206
    %v270 = vpop.f32.mrf.mxu0
    %v271 = vadd.f32 %v187, %v270
    %272 = vmatmul.f32.gmra.mxu0 %v209
    %v273 = vpop.f32.mrf.mxu0
    %v274 = vadd.f32 %v187, %v273
    %275 = vmatmul.f32.gmra.mxu0 %v212
    %v276 = vpop.f32.mrf.mxu0
    %v277 = vadd.f32 %v187, %v276
    %278 = vmatmul.f32.gmra.mxu0 %v215
    %v279 = vpop.f32.mrf.mxu0
    %v280 = vadd.f32 %v187, %v279
    %281 = vmatmul.f32.gmra.mxu0 %v218
    %v282 = vpop.f32.mrf.mxu0
    %v283 = vadd.f32 %v187, %v282
    %284 = vmatmul.f32.gmra.mxu0 %v221
    %v285 = vpop.f32.mrf.mxu0
    %v286 = vadd.f32 %v187, %v285
    %287 = vmatmul.f32.gmra.mxu0 %v224
    %v288 = vpop.f32.mrf.mxu0
    %v289 = vadd.f32 %v187, %v288
    %290 = vmatmul.f32.gmra.mxu0 %v227
    %v291 = vpop.f32.mrf.mxu0
    %v292 = vadd.f32 %v187, %v291
    %293 = vmatmul.f32.gmra.mxu0 %v230
    %v294 = vpop.f32.mrf.mxu0
    %v295 = vadd.f32 %v187, %v294
    %296 = vmatmul.f32.gmra.mxu0 %v233
    %v297 = vpop.f32.mrf.mxu0
    %v298 = vadd.f32 %v187, %v297
    %299 = vmatmul.f32.gmra.mxu0 %v236
    %v300 = vpop.f32.mrf.mxu0
    %v301 = vadd.f32 %v187, %v300
    %302 = vdwg.mxu0
    %v303 = vtanh.pop %v256
    %v304 = vtanh.pop %v259
    %v305 = vtanh.pop %v262
    %v306 = vtanh.pop %v265
    %v307 = vtanh.pop %v268
    %v308 = vtanh.pop %v271
    %v309 = vtanh.pop %v274
    %v310 = vtanh.pop %v277
    %v311 = vtanh.pop %v280
    %v312 = vtanh.pop %v283
    %v313 = vtanh.pop %v286
    %v314 = vtanh.pop %v289
    %v315 = vtanh.pop %v292
    %v316 = vtanh.pop %v295
    %v317 = vtanh.pop %v298
    %v318 = vtanh.pop %v301
    %v319 = vld [vmem:[%s5] sm:$0x1]
    %v321 = vperm.slane %v319, 0
    %v323 = vmul.f32 %v303, %v321
    %v324 = vmul.f32 %v304, %v321
    %v325 = vmul.f32 %v305, %v321
    %v326 = vmul.f32 %v306, %v321
    %v327 = vmul.f32 %v307, %v321
    %v328 = vmul.f32 %v308, %v321
    %v329 = vmul.f32 %v309, %v321
    %v330 = vmul.f32 %v310, %v321
    %v331 = vmul.f32 %v311, %v321
    %v332 = vmul.f32 %v312, %v321
    %v333 = vmul.f32 %v313, %v321
    %v334 = vmul.f32 %v314, %v321
    %v335 = vmul.f32 %v315, %v321
    %v336 = vmul.f32 %v316, %v321
    %v337 = vmul.f32 %v317, %v321
    %v338 = vmul.f32 %v318, %v321
    %v339 = vsel %vm189, %v323, 0.0
    %340 = vadd.xlane.f32.xlu0 %v339
    %v341 = vpop.xlane.xlu0 %340
    %v342 = vsel %vm189, %v324, 0.0
    %343 = vadd.xlane.f32.xlu0 %v342
    %v344 = vpop.xlane.xlu0 %343
    %v345 = vsel %vm189, %v325, 0.0
    %346 = vadd.xlane.f32.xlu0 %v345
    %v347 = vpop.xlane.xlu0 %346
    %v348 = vsel %vm189, %v326, 0.0
    %349 = vadd.xlane.f32.xlu0 %v348
    %v350 = vpop.xlane.xlu0 %349
    %v351 = vsel %vm189, %v327, 0.0
    %352 = vadd.xlane.f32.xlu0 %v351
    %v353 = vpop.xlane.xlu0 %352
    %v354 = vsel %vm189, %v328, 0.0
    %355 = vadd.xlane.f32.xlu0 %v354
    %v356 = vpop.xlane.xlu0 %355
    %v357 = vsel %vm189, %v329, 0.0
    %358 = vadd.xlane.f32.xlu0 %v357
    %v359 = vpop.xlane.xlu0 %358
    %v360 = vsel %vm189, %v330, 0.0
    %361 = vadd.xlane.f32.xlu0 %v360
    %v362 = vpop.xlane.xlu0 %361
    %v363 = vsel %vm189, %v331, 0.0
    %364 = vadd.xlane.f32.xlu0 %v363
    %v365 = vpop.xlane.xlu0 %364
    %v366 = vsel %vm189, %v332, 0.0
    %367 = vadd.xlane.f32.xlu0 %v366
    %v368 = vpop.xlane.xlu0 %367
    %v369 = vsel %vm189, %v333, 0.0
    %370 = vadd.xlane.f32.xlu0 %v369
    %v371 = vpop.xlane.xlu0 %370
    %v372 = vsel %vm189, %v334, 0.0
    %373 = vadd.xlane.f32.xlu0 %v372
    %v374 = vpop.xlane.xlu0 %373
    %v375 = vsel %vm189, %v335, 0.0
    %376 = vadd.xlane.f32.xlu0 %v375
    %v377 = vpop.xlane.xlu0 %376
    %v378 = vsel %vm189, %v336, 0.0
    %379 = vadd.xlane.f32.xlu0 %v378
    %v380 = vpop.xlane.xlu0 %379
    %v381 = vsel %vm189, %v337, 0.0
    %382 = vadd.xlane.f32.xlu0 %v381
    %v383 = vpop.xlane.xlu0 %382
    %v384 = vsel %vm189, %v338, 0.0
    %385 = vadd.xlane.f32.xlu0 %v384
    %v386 = vpop.xlane.xlu0 %385
    %v387 = vld [vmem:[#allocation2] sm:$0x1]
    %389 = vset.pattern.permute.xlu0 0
    %390 = vperm.xlu0 %389, %v387
    %v391 = vpop.permute.xlu0 %390
    %v393 = vperm.slane %v391, 0
    %v394 = vadd.f32 %v341, %v393
    %v395 = vadd.f32 %v344, %v393
    %v396 = vadd.f32 %v347, %v393
    %v397 = vadd.f32 %v350, %v393
    %v398 = vadd.f32 %v353, %v393
    %v399 = vadd.f32 %v356, %v393
    %v400 = vadd.f32 %v359, %v393
    %v401 = vadd.f32 %v362, %v393
    %v402 = vadd.f32 %v365, %v393
    %v403 = vadd.f32 %v368, %v393
    %v404 = vadd.f32 %v371, %v393
    %v405 = vadd.f32 %v374, %v393
    %v406 = vadd.f32 %v377, %v393
    %v407 = vadd.f32 %v380, %v393
    %v408 = vadd.f32 %v383, %v393
    %v409 = vadd.f32 %v386, %v393
    %v426 = vlaneseq
    %v427 = vand.u32 %v426, 127
    %v428 = vperm.slane %v394, %v427
    %v429 = vadd.s32 %v427, 4294967288
    %v430 = vperm.slane %v395, %v429
    %vm431 = vcmask 130112
    %v432 = vsel %vm431, %v430, %v428
    %v433 = vadd.s32 %v427, 4294967280
    %v434 = vperm.slane %v396, %v433
    %vm435 = vcmask 195712
    %v436 = vsel %vm435, %v434, %v432
    %v437 = vadd.s32 %v427, 4294967272
    %v438 = vperm.slane %v397, %v437
    %vm439 = vcmask 261312
    %v440 = vsel %vm439, %v438, %v436
    %v441 = vadd.s32 %v427, 4294967264
    %v442 = vperm.slane %v398, %v441
    %vm443 = vcmask 326912
    %v444 = vsel %vm443, %v442, %v440
    %v445 = vadd.s32 %v427, 4294967256
    %v446 = vperm.slane %v399, %v445
    %vm447 = vcmask 392512
    %v448 = vsel %vm447, %v446, %v444
    %v449 = vadd.s32 %v427, 4294967248
    %v450 = vperm.slane %v400, %v449
    %vm451 = vcmask 458112
    %v452 = vsel %vm451, %v450, %v448
    %v453 = vadd.s32 %v427, 4294967240
    %v454 = vperm.slane %v401, %v453
    %vm455 = vcmask 523712
    %v456 = vsel %vm455, %v454, %v452
    %v457 = vadd.s32 %v427, 4294967232
    %v458 = vperm.slane %v402, %v457
    %vm459 = vcmask 589312
    %v460 = vsel %vm459, %v458, %v456
    %v461 = vadd.s32 %v427, 4294967224
    %v462 = vperm.slane %v403, %v461
    %vm463 = vcmask 654912
    %v464 = vsel %vm463, %v462, %v460
    %v465 = vadd.s32 %v427, 4294967216
    %v466 = vperm.slane %v404, %v465
    %vm467 = vcmask 720512
    %v468 = vsel %vm467, %v466, %v464
    %v469 = vadd.s32 %v427, 4294967208
    %v470 = vperm.slane %v405, %v469
    %vm471 = vcmask 786112
    %v472 = vsel %vm471, %v470, %v468
    %v473 = vadd.s32 %v427, 4294967200
    %v474 = vperm.slane %v406, %v473
    %vm475 = vcmask 851712
    %v476 = vsel %vm475, %v474, %v472
    %v477 = vadd.s32 %v427, 4294967192
    %v478 = vperm.slane %v407, %v477
    %vm479 = vcmask 917312
    %v480 = vsel %vm479, %v478, %v476
    %v481 = vadd.s32 %v427, 4294967184
    %v482 = vperm.slane %v408, %v481
    %vm483 = vcmask 982912
    %v484 = vsel %vm483, %v482, %v480
    %v485 = vadd.s32 %v427, 4294967176
    %v486 = vperm.slane %v409, %v485
    %vm487 = vcmask 1048512
    %v488 = vsel %vm487, %v486, %v484
    %490 = vst [vmem:[#allocation3] sm:$0x1] %v488
    // Predicated region
    $region30: #{tpu_custom_call.1} parent=1 // pred_check
      _
    $region31: #{tpu_custom_call.1} parent=1 // pred_check_branch
      %492 = sbr.rel (0) target = $region33
    $region32: #{tpu_custom_call.1} parent=1 // pred_region
      %494 = vsyncadd [#allocation4], 0
      %s496 = sshll.u32 [#allocation3], 4
      %s497 = int_to_ptr.vmem [resolvable:$true] %s496
      %s498 = sshll.u32 %s7, 4
      %s499 = int_to_ptr.hbm [resolvable:$true] %s498
      %501 = dma.vmem_to_hbm [thread:$0]  %s497, 16, %s499, [#allocation4]
    $region33: #{tpu_custom_call.1} parent=1 // pred_fallthru
      _
    // Predicated region
    $region34: #{tpu_custom_call.1} parent=1 // pred_check
      _
    $region35: #{tpu_custom_call.1} parent=1 // pred_check_branch
      %503 = sbr.rel (0) target = $region37
    $region36: #{tpu_custom_call.1} parent=1 // pred_region
      %505 = dma.done [#allocation4], 16
    $region37: #{tpu_custom_call.1} parent=1 // pred_fallthru
      _
    %506 = vsyncpa [#allocation4], 1

</llo_original>
